<compile_context>
chip_gen: v7x
topology: tpu7x:2x2x1
jax: 0.10.0
libtpu: 0.0.40
codegen_flags: <defaults>
</compile_context>

<pallas_src>
import functools

import jax
import jax.numpy as jnp
from jax.experimental import pallas as pl
from jax.experimental.pallas import tpu as pltpu

_NEG_BIG = -1e30  # "minus infinity" that avoids inf/nan arithmetic in the LSE


def _context_distr_kernel(x_ref, w1_ref, b1_ref, w2_ref, b2_ref, w3_ref, b3_ref,
                          o_ref, stats_ref, *, n_valid):
    i = pl.program_id(0)
    tile_n = o_ref.shape[-1]

    # ---- MLP evaluated "transposed": features on sublanes, batch on lanes. ----
    xt = x_ref[...].astype(jnp.float32)                        # (tile_n, obs_dim), native layout
    # Layer 1 (K = obs_dim, tiny): transpose folded into the dot -> (h1, tile_n), f32.
    h = jnp.dot(w1_ref[...], xt.T, preferred_element_type=jnp.float32)
    h = jnp.maximum(h + b1_ref[...], 0.0)

    # Layer 2: bf16 (or f32) MXU inputs, f32 accumulate -> (h2, tile_n).
    h = jnp.dot(w2_ref[...], h.astype(w2_ref.dtype),
                preferred_element_type=jnp.float32)
    h = jnp.maximum(h + b2_ref[...], 0.0)

    # Last layer (out_features == 1): VPU multiply + sublane-sum reduce. The MXU would
    # waste all but one output column and pay the full drain latency.
    logits = jnp.sum(w3_ref[...] * h, axis=0, keepdims=True) + b3_ref[...]   # (1, tile_n)

    # Mask lanes past the true batch size so garbage in the ragged tail tile never
    # reaches the softmax.
    col = i * tile_n + jax.lax.broadcasted_iota(jnp.int32, (1, tile_n), 1)
    logits = jnp.where(col < n_valid, logits, _NEG_BIG)

    # Lane-dense streamed store of this tile's raw logits.
    o_ref[...] = logits[None]                                   # (1, 1, tile_n)

    # Per-tile softmax partials; combined into the global LSE in the wrapper.
    m_t = jnp.max(logits, axis=1, keepdims=True)                # (1, 1)
    l_t = jnp.sum(jnp.exp(logits - m_t), axis=1, keepdims=True) # (1, 1)
    stats = jnp.concatenate([m_t, l_t], axis=0)                 # (2, 1)
    stats_ref[...] = jnp.broadcast_to(stats[None], (1, 2, 128))


def context_distr_forward(x, params, *, tile_n=1024, compute_dtype=jnp.bfloat16):
    """x: [N, obs_dim] (native PyTorch layout). Returns log_softmax over the batch axis,
    shape [N, 1].

    tile_n: batch rows per grid step (rounded to a multiple of 128, clamped to the batch
            extent). Default 1024 amortizes per-grid-step overhead; VMEM stays O(tile_n).
    compute_dtype: dtype of the layer-2 MXU inputs (default bf16). All accumulation,
            bias+relu, and softmax math stay f32.
    """
    w1, b1, w2, b2, w3, b3 = (params["w1"], params["b1"], params["w2"],
                              params["b2"], params["w3"], params["b3"])
    n, obs_dim = x.shape
    h1 = w1.shape[0]
    h2 = w2.shape[0]

    tile_n = max(128, (int(tile_n) // 128) * 128)
    tile_n = min(tile_n, pl.cdiv(n, 128) * 128)
    num_tiles = pl.cdiv(n, tile_n)

    # Cast the layer-2 weight once here (tiny) instead of once per grid step in-kernel.
    w2c = w2.astype(compute_dtype)

    kernel = functools.partial(_context_distr_kernel, n_valid=n)

    grid_spec = pltpu.PrefetchScalarGridSpec(
        num_scalar_prefetch=0,
        grid=(num_tiles,),
        in_specs=[
            pl.BlockSpec((tile_n, obs_dim), lambda i: (i, 0)),   # x tile: streamed, native layout
            pl.BlockSpec((h1, obs_dim), lambda i: (0, 0)),       # W1: VMEM-resident (f32)
            pl.BlockSpec((h1, 1), lambda i: (0, 0)),             # b1
            pl.BlockSpec((h2, h1), lambda i: (0, 0)),            # W2 (compute_dtype)
            pl.BlockSpec((h2, 1), lambda i: (0, 0)),             # b2
            pl.BlockSpec((h2, 1), lambda i: (0, 0)),             # w3 (column)
            pl.BlockSpec((1, 1), lambda i: (0, 0)),              # b3
        ],
        out_specs=[
            # Streamed lane-dense logits: one (1, tile_n) row per grid step.
            pl.BlockSpec((1, 1, tile_n), lambda i: (i, 0, 0)),
            # Per-tile (m, l) softmax partials.
            pl.BlockSpec((1, 2, 128), lambda i: (i, 0, 0)),
        ],
    )

    logits_t, stats = pl.pallas_call(
        kernel,
        out_shape=(jax.ShapeDtypeStruct((num_tiles, 1, tile_n), jnp.float32),
                   jax.ShapeDtypeStruct((num_tiles, 2, 128), jnp.float32)),
        grid_spec=grid_spec,
        compiler_params=pltpu.CompilerParams(
            # Tiles are independent (per-tile partial stats), so the batch axis is safe to
            # shard across both v7x TensorCores.
            dimension_semantics=("parallel",)),
    )(x, w1, b1, w2c, b2, w3, b3)

    # Combine per-tile (m, l) into the global log-sum-exp and subtract it in one cheap
    # XLA elementwise pass (masked lanes hold _NEG_BIG and contribute exp(...) == 0).
    m_t = stats[:, 0, 0]                                        # (num_tiles,)
    l_t = stats[:, 1, 0]
    m_g = jnp.max(m_t)
    lse = m_g + jnp.log(jnp.sum(l_t * jnp.exp(m_t - m_g)))

    # Back to the PyTorch output layout [N, 1].
    return (logits_t.reshape(-1)[:n] - lse).reshape(n, 1)


def init_params(key, obs_dim, hidden_sizes=(64, 64)):
    """'normal' init mirroring the module. Weights in PyTorch [out, in] layout; biases as
    [out, 1] columns; the last-layer weight is stored as an [h2, 1] column (scale=0.01)."""
    k1, k2, k3 = jax.random.split(key, 3)
    h1, h2 = hidden_sizes
    w1 = jax.random.normal(k1, (h1, obs_dim), jnp.float32) / jnp.sqrt(obs_dim)
    b1 = jnp.zeros((h1, 1), jnp.float32)
    w2 = jax.random.normal(k2, (h2, h1), jnp.float32) / jnp.sqrt(h1)
    b2 = jnp.zeros((h2, 1), jnp.float32)
    w3 = 0.01 * jax.random.normal(k3, (h2, 1), jnp.float32)
    b3 = jnp.zeros((1, 1), jnp.float32)
    return {"w1": w1, "b1": b1, "w2": w2, "b2": b2, "w3": w3, "b3": b3}


def _reference_forward(x, p):
    h = jnp.maximum(x @ p["w1"].T + p["b1"].T, 0.0)
    h = jnp.maximum(h @ p["w2"].T + p["b2"].T, 0.0)
    logits = h @ p["w3"] + p["b3"]                 # [N, 1]
    return jax.nn.log_softmax(logits, axis=0)


if __name__ == "__main__":
    key = jax.random.PRNGKey(0)
    kx, kp, kx2 = jax.random.split(key, 3)

    N, OBS_DIM = 8, 4                 # small batch of context vectors
    HIDDEN = (64, 64)                 # module default hidden_sizes

    x = jax.random.normal(kx, (N, OBS_DIM), jnp.float32)
    params = init_params(kp, OBS_DIM, HIDDEN)

    # Case 1: single partial tile, f32 path, strict tolerance.
    out = jax.block_until_ready(
        context_distr_forward(x, params, tile_n=128, compute_dtype=jnp.float32))
    ref = _reference_forward(x, params)
    assert out.shape == (N, 1)
    assert jnp.allclose(out, ref, atol=1e-4, rtol=1e-4), "mismatch vs pure-JAX reference"
    assert jnp.allclose(jnp.sum(jnp.exp(out), axis=0), 1.0, atol=1e-4)

    # Case 2: multiple grid tiles + ragged tail (N not a multiple of the tile), f32 path.
    N2 = 300
    x2 = jax.random.normal(kx2, (N2, OBS_DIM), jnp.float32)
    out2 = jax.block_until_ready(
        context_distr_forward(x2, params, tile_n=128, compute_dtype=jnp.float32))
    ref2 = _reference_forward(x2, params)
    assert out2.shape == (N2, 1)
    assert jnp.allclose(out2, ref2, atol=1e-4, rtol=1e-4), "mismatch (gridded case)"
    assert jnp.allclose(jnp.sum(jnp.exp(out2), axis=0), 1.0, atol=1e-4)

    # Case 3: default config (big tile clamp + bf16 layer-2 inputs); looser tolerance
    # covers the expected bf16 rounding vs the f32 reference.
    out3 = jax.block_until_ready(context_distr_forward(x2, params))
    assert out3.shape == (N2, 1)
    assert jnp.allclose(out3, ref2, atol=5e-2), "mismatch (bf16 default path)"
    assert jnp.allclose(jnp.sum(jnp.exp(out3), axis=0), 1.0, atol=1e-3)

    print("KERNEL_OK")
</pallas_src>

<mosaic_0001>
module attributes {stable_mosaic.version = 11 : i64} {
  func.func @_context_distr_kernel(%arg0: i32, %arg1: memref<128x4xf32, #tpu.memory_space<vmem>>, %arg2: memref<64x4xf32, #tpu.memory_space<vmem>>, %arg3: memref<64x1xf32, #tpu.memory_space<vmem>>, %arg4: memref<64x64xf32, #tpu.memory_space<vmem>>, %arg5: memref<64x1xf32, #tpu.memory_space<vmem>>, %arg6: memref<64x1xf32, #tpu.memory_space<vmem>>, %arg7: memref<1x1xf32, #tpu.memory_space<vmem>>, %arg8: memref<1x1x128xf32, #tpu.memory_space<vmem>>, %arg9: memref<1x2x128xf32, #tpu.memory_space<vmem>>) attributes {dimension_semantics = [#tpu.dimension_semantics<parallel>], iteration_bounds = array<i64: 1>, scalar_prefetch = 0 : i64, scratch_operands = 0 : i64, tpu.core_type = #tpu.core_type<tc>, window_params = [{transform_indices = @transform_0, window_bounds = array<i64: 128, 4>}, {pipeline_mode = #tpu.pipeline_mode<synchronous>, transform_indices = @transform_1, window_bounds = array<i64: 64, 4>}, {pipeline_mode = #tpu.pipeline_mode<synchronous>, transform_indices = @transform_2, window_bounds = array<i64: 64, 1>}, {pipeline_mode = #tpu.pipeline_mode<synchronous>, transform_indices = @transform_3, window_bounds = array<i64: 64, 64>}, {pipeline_mode = #tpu.pipeline_mode<synchronous>, transform_indices = @transform_4, window_bounds = array<i64: 64, 1>}, {pipeline_mode = #tpu.pipeline_mode<synchronous>, transform_indices = @transform_5, window_bounds = array<i64: 64, 1>}, {pipeline_mode = #tpu.pipeline_mode<synchronous>, transform_indices = @transform_6, window_bounds = array<i64: 1, 1>}, {transform_indices = @transform_7, window_bounds = array<i64: 1, 1, 128>}, {transform_indices = @transform_8, window_bounds = array<i64: 1, 2, 128>}]} {
    %c0 = arith.constant 0 : index
    %c0_0 = arith.constant 0 : index
    %0 = vector.load %arg1[%c0, %c0_0] : memref<128x4xf32, #tpu.memory_space<vmem>>, vector<128x4xf32>
    %c0_1 = arith.constant 0 : index
    %c0_2 = arith.constant 0 : index
    %1 = vector.load %arg2[%c0_1, %c0_2] : memref<64x4xf32, #tpu.memory_space<vmem>>, vector<64x4xf32>
    %2 = tpu.transpose %0, [1, 0] : vector<128x4xf32> -> vector<4x128xf32>
    %cst = arith.constant dense<0.000000e+00> : vector<64x128xf32>
    %3 = tpu.matmul %1, %2, %cst {dimension_numbers = #tpu.dot_dimension_numbers<[1], [0], [0], [1], [0, 0, 1, 1], [], []>} : vector<64x4xf32>, vector<4x128xf32>, vector<64x128xf32> -> vector<64x128xf32>
    %c0_3 = arith.constant 0 : index
    %c0_4 = arith.constant 0 : index
    %4 = vector.load %arg3[%c0_3, %c0_4] : memref<64x1xf32, #tpu.memory_space<vmem>>, vector<64x1xf32>
    %5 = vector.broadcast %4 : vector<64x1xf32> to vector<64x128xf32>
    %6 = arith.addf %3, %5 : vector<64x128xf32>
    %cst_5 = arith.constant 0.000000e+00 : f32
    %7 = vector.broadcast %cst_5 : f32 to vector<64x128xf32>
    %8 = arith.maximumf %6, %7 : vector<64x128xf32>
    %c0_6 = arith.constant 0 : index
    %c0_7 = arith.constant 0 : index
    %9 = vector.load %arg4[%c0_6, %c0_7] : memref<64x64xf32, #tpu.memory_space<vmem>>, vector<64x64xf32>
    %cst_8 = arith.constant dense<0.000000e+00> : vector<64x128xf32>
    %10 = tpu.matmul %9, %8, %cst_8 {dimension_numbers = #tpu.dot_dimension_numbers<[1], [0], [0], [1], [0, 0, 1, 1], [], []>} : vector<64x64xf32>, vector<64x128xf32>, vector<64x128xf32> -> vector<64x128xf32>
    %c0_9 = arith.constant 0 : index
    %c0_10 = arith.constant 0 : index
    %11 = vector.load %arg5[%c0_9, %c0_10] : memref<64x1xf32, #tpu.memory_space<vmem>>, vector<64x1xf32>
    %12 = vector.broadcast %11 : vector<64x1xf32> to vector<64x128xf32>
    %13 = arith.addf %10, %12 : vector<64x128xf32>
    %cst_11 = arith.constant 0.000000e+00 : f32
    %14 = vector.broadcast %cst_11 : f32 to vector<64x128xf32>
    %15 = arith.maximumf %13, %14 : vector<64x128xf32>
    %c0_12 = arith.constant 0 : index
    %c0_13 = arith.constant 0 : index
    %16 = vector.load %arg6[%c0_12, %c0_13] : memref<64x1xf32, #tpu.memory_space<vmem>>, vector<64x1xf32>
    %17 = vector.broadcast %16 : vector<64x1xf32> to vector<64x128xf32>
    %18 = arith.mulf %17, %15 : vector<64x128xf32>
    %cst_14 = arith.constant dense<0.000000e+00> : vector<128xf32>
    %19 = vector.multi_reduction <add>, %18, %cst_14 [0] : vector<64x128xf32> to vector<128xf32>
    %20 = vector.shape_cast %19 : vector<128xf32> to vector<1x128xf32>
    %c0_15 = arith.constant 0 : index
    %c0_16 = arith.constant 0 : index
    %21 = vector.load %arg7[%c0_15, %c0_16] : memref<1x1xf32, #tpu.memory_space<vmem>>, vector<1x1xf32>
    %22 = vector.broadcast %21 : vector<1x1xf32> to vector<1x128xf32>
    %23 = arith.addf %20, %22 : vector<1x128xf32>
    %c128_i32 = arith.constant 128 : i32
    %24 = arith.muli %arg0, %c128_i32 : i32
    %25 = tpu.iota {dimensions = array<i32: 1>} : vector<1x128xi32>
    %26 = vector.broadcast %24 : i32 to vector<1x128xi32>
    %27 = arith.addi %26, %25 : vector<1x128xi32>
    %c8_i32 = arith.constant 8 : i32
    %28 = vector.broadcast %c8_i32 : i32 to vector<1x128xi32>
    %29 = arith.cmpi slt, %27, %28 : vector<1x128xi32>
    %cst_17 = arith.constant -1.000000e+30 : f32
    %30 = vector.broadcast %cst_17 : f32 to vector<1x128xf32>
    %31 = arith.select %29, %23, %30 : vector<1x128xi1>, vector<1x128xf32>
    %32 = vector.shape_cast %31 : vector<1x128xf32> to vector<1x1x128xf32>
    %c0_18 = arith.constant 0 : index
    %c0_19 = arith.constant 0 : index
    %c0_20 = arith.constant 0 : index
    %33 = vector.load %arg8[%c0_18, %c0_19, %c0_20] : memref<1x1x128xf32, #tpu.memory_space<vmem>>, vector<1x1x128xf32>
    tpu.vector_store %arg8[%c0_18, %c0_19, %c0_20], %32 {strides = array<i32>} : memref<1x1x128xf32, #tpu.memory_space<vmem>>, vector<1x1x128xf32>,
    %cst_21 = arith.constant dense<0xFF800000> : vector<1xf32>
    %34 = vector.multi_reduction <maximumf>, %31, %cst_21 [1] : vector<1x128xf32> to vector<1xf32>
    %35 = vector.shape_cast %34 : vector<1xf32> to vector<1x1xf32>
    %36 = vector.broadcast %35 : vector<1x1xf32> to vector<1x128xf32>
    %37 = arith.subf %31, %36 : vector<1x128xf32>
    %38 = math.exp %37 : vector<1x128xf32>
    %cst_22 = arith.constant dense<0.000000e+00> : vector<1xf32>
    %39 = vector.multi_reduction <add>, %38, %cst_22 [1] : vector<1x128xf32> to vector<1xf32>
    %40 = vector.shape_cast %39 : vector<1xf32> to vector<1x1xf32>
    %41 = tpu.concatenate %35, %40 in 0 : vector<1x1xf32>, vector<1x1xf32> -> vector<2x1xf32>
    %42 = vector.shape_cast %41 : vector<2x1xf32> to vector<1x2x1xf32>
    %43 = vector.shape_cast %42 : vector<1x2x1xf32> to vector<1x2x1xf32>
    %44 = vector.broadcast %43 : vector<1x2x1xf32> to vector<1x2x128xf32>
    %c0_23 = arith.constant 0 : index
    %c0_24 = arith.constant 0 : index
    %c0_25 = arith.constant 0 : index
    %45 = vector.load %arg9[%c0_23, %c0_24, %c0_25] : memref<1x2x128xf32, #tpu.memory_space<vmem>>, vector<1x2x128xf32>
    tpu.vector_store %arg9[%c0_23, %c0_24, %c0_25], %44 {strides = array<i32>} : memref<1x2x128xf32, #tpu.memory_space<vmem>>, vector<1x2x128xf32>,
    return
  }
  func.func @transform_0(%arg0: i32) -> (i32, i32) {
    %c0_i32 = arith.constant 0 : i32
    %c0_i32_0 = arith.constant 0 : i32
    return %arg0, %c0_i32 : i32, i32
  }
  func.func @transform_1(%arg0: i32) -> (i32, i32) {
    %c0_i32 = arith.constant 0 : i32
    %c0_i32_0 = arith.constant 0 : i32
    %c0_i32_1 = arith.constant 0 : i32
    return %c0_i32, %c0_i32_0 : i32, i32
  }
  func.func @transform_2(%arg0: i32) -> (i32, i32) {
    %c0_i32 = arith.constant 0 : i32
    %c0_i32_0 = arith.constant 0 : i32
    %c0_i32_1 = arith.constant 0 : i32
    return %c0_i32, %c0_i32_0 : i32, i32
  }
  func.func @transform_3(%arg0: i32) -> (i32, i32) {
    %c0_i32 = arith.constant 0 : i32
    %c0_i32_0 = arith.constant 0 : i32
    %c0_i32_1 = arith.constant 0 : i32
    return %c0_i32, %c0_i32_0 : i32, i32
  }
  func.func @transform_4(%arg0: i32) -> (i32, i32) {
    %c0_i32 = arith.constant 0 : i32
    %c0_i32_0 = arith.constant 0 : i32
    %c0_i32_1 = arith.constant 0 : i32
    return %c0_i32, %c0_i32_0 : i32, i32
  }
  func.func @transform_5(%arg0: i32) -> (i32, i32) {
    %c0_i32 = arith.constant 0 : i32
    %c0_i32_0 = arith.constant 0 : i32
    %c0_i32_1 = arith.constant 0 : i32
    return %c0_i32, %c0_i32_0 : i32, i32
  }
  func.func @transform_6(%arg0: i32) -> (i32, i32) {
    %c0_i32 = arith.constant 0 : i32
    %c0_i32_0 = arith.constant 0 : i32
    %c0_i32_1 = arith.constant 0 : i32
    return %c0_i32, %c0_i32_0 : i32, i32
  }
  func.func @transform_7(%arg0: i32) -> (i32, i32, i32) {
    %c0_i32 = arith.constant 0 : i32
    %c0_i32_0 = arith.constant 0 : i32
    %c0_i32_1 = arith.constant 0 : i32
    return %arg0, %c0_i32, %c0_i32_0 : i32, i32, i32
  }
  func.func @transform_8(%arg0: i32) -> (i32, i32, i32) {
    %c0_i32 = arith.constant 0 : i32
    %c0_i32_0 = arith.constant 0 : i32
    %c0_i32_1 = arith.constant 0 : i32
    return %arg0, %c0_i32, %c0_i32_0 : i32, i32, i32
  }
}

</mosaic_0001>

<llo_original>
// kernel: tpu_custom_call.1
$region0: #{tpu_custom_call.1}
  #allocation0 [shape = 'u32[]', space=smem, size = 0x4, offset = 0x4, fixed_abs, tag = 'smem constant byte address 0x4 - core index']
  #allocation1 [shape = 'u32[144,128]{1,0:T(1,128)}', space=vmem, size = 0x12000, scoped, tag = 'internal scratch']
  #allocation2 [shape = 'f32[1,1]{1,0:T(1,128)S(1)}', space=vmem, size = 0x200, scoped, tag = 'scoped memory for tpu_custom_call.1']
  %s0 = inlined_call_operand.vmem [shape: f32[8,4], index: 0, kind: input, shape index: {}]
  %s1 = inlined_call_operand.vmem [shape: f32[64,4], index: 1, kind: input, shape index: {}]
  %s2 = inlined_call_operand.vmem [shape: f32[64,1], index: 2, kind: input, shape index: {}]
  %s3 = inlined_call_operand.vmem [shape: f32[64,64], index: 3, kind: input, shape index: {}]
  %s4 = inlined_call_operand.vmem [shape: f32[64,1], index: 4, kind: input, shape index: {}]
  %s5 = inlined_call_operand.vmem [shape: f32[64,1], index: 5, kind: input, shape index: {}]
  %s6 = inlined_call_operand.<no memory space> [shape: f32[1,1], index: 6, kind: input, shape index: {}]
  %s7 = inlined_call_operand.hbm [shape: f32[1,1,128], index: 7, kind: output, shape index: {0}]
  %s8 = inlined_call_operand.hbm [shape: f32[1,2,128], index: 8, kind: output, shape index: {1}]
  %9 = xla_tuple %s7, %s8
  %s10 = sld [smem:[#allocation0]]
  $region46: #{tpu_custom_call.1} parent=0
    _
  %s12 = ssub.s32 1, %s10
  %s13 = scalar_select 0, %s12, %s10
  %v14 = vstv %s6
  %15 = vst [vmem:[#allocation2] sm:$0x1] %v14
  $region1: #{tpu_custom_call.1} parent=0
    #allocation3 [shape = 'u8[512]{0}', space=vmem, size = 0x400, scoped, tag = 'output window, operand 0, single buffered']
    #allocation4 [shape = 's32[1]{0}', space=sflag, size = 0x4, scoped, tag = 'scoped memory for tpu_custom_call.1']
    #allocation5 [shape = 'u8[1024]{0}', space=vmem, size = 0x400, scoped, tag = 'output window, operand 1, single buffered']
    #allocation6 [shape = 's32[1]{0}', space=sflag, size = 0x4, scoped, tag = 'scoped memory for tpu_custom_call.1']
    %16 = vsyncpa [#allocation4], 0
    %17 = vsyncpa [#allocation6], 0
    // Predicated region
    $region2: #{tpu_custom_call.1} parent=1 // pred_check
      _
    $region3: #{tpu_custom_call.1} parent=1 // pred_check_branch
      %19 = sbr.rel (0) target = $region5
    $region4: #{tpu_custom_call.1} parent=1 // pred_region
      _
    $region5: #{tpu_custom_call.1} parent=1 // pred_fallthru
      _
    // Predicated region
    $region6: #{tpu_custom_call.1} parent=1 // pred_check
      _
    $region7: #{tpu_custom_call.1} parent=1 // pred_check_branch
      %21 = sbr.rel (0) target = $region9
    $region8: #{tpu_custom_call.1} parent=1 // pred_region
      _
    $region9: #{tpu_custom_call.1} parent=1 // pred_fallthru
      _
    // Predicated region
    $region10: #{tpu_custom_call.1} parent=1 // pred_check
      _
    $region11: #{tpu_custom_call.1} parent=1 // pred_check_branch
      %23 = sbr.rel (0) target = $region13
    $region12: #{tpu_custom_call.1} parent=1 // pred_region
      _
    $region13: #{tpu_custom_call.1} parent=1 // pred_fallthru
      _
    // Predicated region
    $region14: #{tpu_custom_call.1} parent=1 // pred_check
      _
    $region15: #{tpu_custom_call.1} parent=1 // pred_check_branch
      %25 = sbr.rel (0) target = $region17
    $region16: #{tpu_custom_call.1} parent=1 // pred_region
      _
    $region17: #{tpu_custom_call.1} parent=1 // pred_fallthru
      _
    // Predicated region
    $region18: #{tpu_custom_call.1} parent=1 // pred_check
      _
    $region19: #{tpu_custom_call.1} parent=1 // pred_check_branch
      %27 = sbr.rel (0) target = $region21
    $region20: #{tpu_custom_call.1} parent=1 // pred_region
      _
    $region21: #{tpu_custom_call.1} parent=1 // pred_fallthru
      _
    // Predicated region
    $region22: #{tpu_custom_call.1} parent=1 // pred_check
      _
    $region23: #{tpu_custom_call.1} parent=1 // pred_check_branch
      %29 = sbr.rel (0) target = $region25
    $region24: #{tpu_custom_call.1} parent=1 // pred_region
      _
    $region25: #{tpu_custom_call.1} parent=1 // pred_fallthru
      _
    // Predicated region
    $region26: #{tpu_custom_call.1} parent=1 // pred_check
      _
    $region27: #{tpu_custom_call.1} parent=1 // pred_check_branch
      %31 = sbr.rel (0) target = $region29
    $region28: #{tpu_custom_call.1} parent=1 // pred_region
      _
    $region29: #{tpu_custom_call.1} parent=1 // pred_fallthru
      _
    %v32 = vld [vmem:[%s0] sm:$0xff]
    %v33 = vld [vmem:[%s0 + $0x8] sm:$0xff]
    %v34 = vld [vmem:[%s0 + $0x10] sm:$0xff]
    %v35 = vld [vmem:[%s0 + $0x18] sm:$0xff]
    %v36 = vld [vmem:[%s0 + $0x20] sm:$0xff]
    %v37 = vld [vmem:[%s0 + $0x28] sm:$0xff]
    %v38 = vld [vmem:[%s0 + $0x30] sm:$0xff]
    %v39 = vld [vmem:[%s0 + $0x38] sm:$0xff]
    %v40 = vld [vmem:[%s0 + $0x40] sm:$0xff]
    %v41 = vld [vmem:[%s0 + $0x48] sm:$0xff]
    %v42 = vld [vmem:[%s0 + $0x50] sm:$0xff]
    %v43 = vld [vmem:[%s0 + $0x58] sm:$0xff]
    %v44 = vld [vmem:[%s0 + $0x60] sm:$0xff]
    %v45 = vld [vmem:[%s0 + $0x68] sm:$0xff]
    %v46 = vld [vmem:[%s0 + $0x70] sm:$0xff]
    %v47 = vld [vmem:[%s0 + $0x78] sm:$0xff]
    %v48 = vld [vmem:[%s1] sm:$0xff]
    %v49 = vld [vmem:[%s1 + $0x8] sm:$0xff]
    %v50 = vld [vmem:[%s1 + $0x10] sm:$0xff]
    %v51 = vld [vmem:[%s1 + $0x18] sm:$0xff]
    %v52 = vld [vmem:[%s1 + $0x20] sm:$0xff]
    %v53 = vld [vmem:[%s1 + $0x28] sm:$0xff]
    %v54 = vld [vmem:[%s1 + $0x30] sm:$0xff]
    %v55 = vld [vmem:[%s1 + $0x38] sm:$0xff]
    %v56 = vld [vmem:[%s2] sm:$0xff]
    %v57 = vld [vmem:[%s2 + $0x8] sm:$0xff]
    %v58 = vld [vmem:[%s2 + $0x10] sm:$0xff]
    %v59 = vld [vmem:[%s2 + $0x18] sm:$0xff]
    %v60 = vld [vmem:[%s2 + $0x20] sm:$0xff]
    %v61 = vld [vmem:[%s2 + $0x28] sm:$0xff]
    %v62 = vld [vmem:[%s2 + $0x30] sm:$0xff]
    %v63 = vld [vmem:[%s2 + $0x38] sm:$0xff]
    %65 = vset.pattern.permute.xlu0 0
    %66 = vperm.xlu0 %65, %v56
    %v67 = vpop.permute.xlu0 %66
    %70 = vset.pattern.permute.xlu0 0
    %71 = vperm.xlu0 %70, %v57
    %v72 = vpop.permute.xlu0 %71
    %75 = vset.pattern.permute.xlu0 0
    %76 = vperm.xlu0 %75, %v58
    %v77 = vpop.permute.xlu0 %76
    %80 = vset.pattern.permute.xlu0 0
    %81 = vperm.xlu0 %80, %v59
    %v82 = vpop.permute.xlu0 %81
    %85 = vset.pattern.permute.xlu0 0
    %86 = vperm.xlu0 %85, %v60
    %v87 = vpop.permute.xlu0 %86
    %90 = vset.pattern.permute.xlu0 0
    %91 = vperm.xlu0 %90, %v61
    %v92 = vpop.permute.xlu0 %91
    %95 = vset.pattern.permute.xlu0 0
    %96 = vperm.xlu0 %95, %v62
    %v97 = vpop.permute.xlu0 %96
    %100 = vset.pattern.permute.xlu0 0
    %101 = vperm.xlu0 %100, %v63
    %v102 = vpop.permute.xlu0 %101
    %vm104 = vcmask 31744
    %v106 = vsel %vm104, %v48, 0
    %v109 = vsel %vm104, %v49, 0
    %v112 = vsel %vm104, %v50, 0
    %v115 = vsel %vm104, %v51, 0
    %v118 = vsel %vm104, %v52, 0
    %v121 = vsel %vm104, %v53, 0
    %v124 = vsel %vm104, %v54, 0
    %v127 = vsel %vm104, %v55, 0
    %v130 = vsel %vm104, %v32, 0
    %v133 = vsel %vm104, %v33, 0
    %v136 = vsel %vm104, %v34, 0
    %v139 = vsel %vm104, %v35, 0
    %v142 = vsel %vm104, %v36, 0
    %v145 = vsel %vm104, %v37, 0
    %v148 = vsel %vm104, %v38, 0
    %v151 = vsel %vm104, %v39, 0
    %v154 = vsel %vm104, %v40, 0
    %v157 = vsel %vm104, %v41, 0
    %v160 = vsel %vm104, %v42, 0
    %v163 = vsel %vm104, %v43, 0
    %v166 = vsel %vm104, %v44, 0
    %v169 = vsel %vm104, %v45, 0
    %v172 = vsel %vm104, %v46, 0
    %v175 = vsel %vm104, %v47, 0
    %177 = vmatprep.subr.mxu0 0.0
    %178 = vmatpush1.xpose.msra.mxu0 %v130
    %179 = vmatprep.subr.mxu0 0.0
    %180 = vmatpush1.xpose.msra.mxu0 %v133
    %181 = vmatprep.subr.mxu0 0.0
    %182 = vmatpush1.xpose.msra.mxu0 %v136
    %183 = vmatprep.subr.mxu0 0.0
    %184 = vmatpush1.xpose.msra.mxu0 %v139
    %185 = vmatprep.subr.mxu0 0.0
    %186 = vmatpush1.xpose.msra.mxu0 %v142
    %187 = vmatprep.subr.mxu0 0.0
    %188 = vmatpush1.xpose.msra.mxu0 %v145
    %189 = vmatprep.subr.mxu0 0.0
    %190 = vmatpush1.xpose.msra.mxu0 %v148
    %191 = vmatprep.subr.mxu0 0.0
    %192 = vmatpush1.xpose.msra.mxu0 %v151
    %193 = vmatprep.subr.mxu0 0.0
    %194 = vmatpush1.xpose.msra.mxu0 %v154
    %195 = vmatprep.subr.mxu0 0.0
    %196 = vmatpush1.xpose.msra.mxu0 %v157
    %197 = vmatprep.subr.mxu0 0.0
    %198 = vmatpush1.xpose.msra.mxu0 %v160
    %199 = vmatprep.subr.mxu0 0.0
    %200 = vmatpush1.xpose.msra.mxu0 %v163
    %201 = vmatprep.subr.mxu0 0.0
    %202 = vmatpush1.xpose.msra.mxu0 %v166
    %203 = vmatprep.subr.mxu0 0.0
    %204 = vmatpush1.xpose.msra.mxu0 %v169
    %205 = vmatprep.subr.mxu0 0.0
    %206 = vmatpush1.xpose.msra.mxu0 %v172
    %207 = vmatprep.subr.mxu0 0.0
    %208 = vmatpush1.xpose.msra.mxu0 %v175
    %209 = vmatprep.subr.mxu0 0.0
    %210 = vmatpush1.xpose.msra.mxu0 0.0
    %211 = vmatprep.subr.mxu0 0.0
    %212 = vmatpush1.xpose.msra.mxu0 0.0
    %213 = vmatprep.subr.mxu0 0.0
    %214 = vmatpush1.xpose.msra.mxu0 0.0
    %215 = vmatprep.subr.mxu0 0.0
    %216 = vmatpush1.xpose.msra.mxu0 0.0
    %217 = vmatprep.subr.mxu0 0.0
    %218 = vmatpush1.xpose.msra.mxu0 0.0
    %219 = vmatprep.subr.mxu0 0.0
    %220 = vmatpush1.xpose.msra.mxu0 0.0
    %221 = vmatprep.subr.mxu0 0.0
    %222 = vmatpush1.xpose.msra.mxu0 0.0
    %223 = vmatprep.subr.mxu0 0.0
    %224 = vmatpush1.xpose.msra.mxu0 0.0
    %225 = vmatprep.subr.mxu0 0.0
    %226 = vmatpush1.xpose.msra.mxu0 0.0
    %227 = vmatprep.subr.mxu0 0.0
    %228 = vmatpush1.xpose.msra.mxu0 0.0
    %229 = vmatprep.subr.mxu0 0.0
    %230 = vmatpush1.xpose.msra.mxu0 0.0
    %231 = vmatprep.subr.mxu0 0.0
    %232 = vmatpush1.xpose.msra.mxu0 0.0
    %233 = vmatprep.subr.mxu0 0.0
    %234 = vmatpush1.xpose.msra.mxu0 0.0
    %235 = vmatprep.subr.mxu0 0.0
    %236 = vmatpush1.xpose.msra.mxu0 0.0
    %237 = vmatprep.subr.mxu0 0.0
    %238 = vmatpush1.xpose.msra.mxu0 0.0
    %239 = vmatprep.subr.mxu0 0.0
    %240 = vmatpush1.xpose.msra.mxu0 0.0
    %241 = vmatprep.mubr.f32.mxu0 0.0
    %242 = vmatmul.mubr.f32.gmra.mrb[0].mxu0 %v106
    %v243 = vpop.f32.mrb[0].mxu0
    %v244 = vadd.f32 %v67, %v243
    %v245 = vpop.f32.mrb[0].mxu0
    %246 = vmatprep.mubr.f32.mxu0 0.0
    %247 = vmatmul.mubr.f32.gmra.mrb[0].mxu0 %v109
    %v248 = vpop.f32.mrb[0].mxu0
    %v249 = vadd.f32 %v72, %v248
    %v250 = vpop.f32.mrb[0].mxu0
    %251 = vmatprep.mubr.f32.mxu0 0.0
    %252 = vmatmul.mubr.f32.gmra.mrb[0].mxu0 %v112
    %v253 = vpop.f32.mrb[0].mxu0
    %v254 = vadd.f32 %v77, %v253
    %v255 = vpop.f32.mrb[0].mxu0
    %256 = vmatprep.mubr.f32.mxu0 0.0
    %257 = vmatmul.mubr.f32.gmra.mrb[0].mxu0 %v115
    %v258 = vpop.f32.mrb[0].mxu0
    %v259 = vadd.f32 %v82, %v258
    %v260 = vpop.f32.mrb[0].mxu0
    %261 = vmatprep.mubr.f32.mxu0 0.0
    %262 = vmatmul.mubr.f32.gmra.mrb[0].mxu0 %v118
    %v263 = vpop.f32.mrb[0].mxu0
    %v264 = vadd.f32 %v87, %v263
    %v265 = vpop.f32.mrb[0].mxu0
    %266 = vmatprep.mubr.f32.mxu0 0.0
    %267 = vmatmul.mubr.f32.gmra.mrb[0].mxu0 %v121
    %v268 = vpop.f32.mrb[0].mxu0
    %v269 = vadd.f32 %v92, %v268
    %v270 = vpop.f32.mrb[0].mxu0
    %271 = vmatprep.mubr.f32.mxu0 0.0
    %272 = vmatmul.mubr.f32.gmra.mrb[0].mxu0 %v124
    %v273 = vpop.f32.mrb[0].mxu0
    %v274 = vadd.f32 %v97, %v273
    %v275 = vpop.f32.mrb[0].mxu0
    %276 = vmatprep.mubr.f32.mxu0 0.0
    %277 = vmatmul.mubr.f32.gmra.mrb[0].mxu0 %v127
    %v278 = vpop.f32.mrb[0].mxu0
    %v279 = vadd.f32 %v102, %v278
    %v280 = vpop.f32.mrb[0].mxu0
    %281 = vdwg.mxu0
    %v282 = vmax.f32 %v244, 0.0
    %v283 = vmax.f32 %v249, 0.0
    %v284 = vmax.f32 %v254, 0.0
    %v285 = vmax.f32 %v259, 0.0
    %v286 = vmax.f32 %v264, 0.0
    %v287 = vmax.f32 %v269, 0.0
    %v288 = vmax.f32 %v274, 0.0
    %v289 = vmax.f32 %v279, 0.0
    %v290 = vld [vmem:[%s3] sm:$0xff]
    %v291 = vld [vmem:[%s3 + $0x8] sm:$0xff]
    %v292 = vld [vmem:[%s3 + $0x10] sm:$0xff]
    %v293 = vld [vmem:[%s3 + $0x18] sm:$0xff]
    %v294 = vld [vmem:[%s3 + $0x20] sm:$0xff]
    %v295 = vld [vmem:[%s3 + $0x28] sm:$0xff]
    %v296 = vld [vmem:[%s3 + $0x30] sm:$0xff]
    %v297 = vld [vmem:[%s3 + $0x38] sm:$0xff]
    %v298 = vld [vmem:[%s4] sm:$0xff]
    %v299 = vld [vmem:[%s4 + $0x8] sm:$0xff]
    %v300 = vld [vmem:[%s4 + $0x10] sm:$0xff]
    %v301 = vld [vmem:[%s4 + $0x18] sm:$0xff]
    %v302 = vld [vmem:[%s4 + $0x20] sm:$0xff]
    %v303 = vld [vmem:[%s4 + $0x28] sm:$0xff]
    %v304 = vld [vmem:[%s4 + $0x30] sm:$0xff]
    %v305 = vld [vmem:[%s4 + $0x38] sm:$0xff]
    %307 = vset.pattern.permute.xlu0 0
    %308 = vperm.xlu0 %307, %v298
    %v309 = vpop.permute.xlu0 %308
    %312 = vset.pattern.permute.xlu0 0
    %313 = vperm.xlu0 %312, %v299
    %v314 = vpop.permute.xlu0 %313
    %317 = vset.pattern.permute.xlu0 0
    %318 = vperm.xlu0 %317, %v300
    %v319 = vpop.permute.xlu0 %318
    %322 = vset.pattern.permute.xlu0 0
    %323 = vperm.xlu0 %322, %v301
    %v324 = vpop.permute.xlu0 %323
    %327 = vset.pattern.permute.xlu0 0
    %328 = vperm.xlu0 %327, %v302
    %v329 = vpop.permute.xlu0 %328
    %332 = vset.pattern.permute.xlu0 0
    %333 = vperm.xlu0 %332, %v303
    %v334 = vpop.permute.xlu0 %333
    %337 = vset.pattern.permute.xlu0 0
    %338 = vperm.xlu0 %337, %v304
    %v339 = vpop.permute.xlu0 %338
    %342 = vset.pattern.permute.xlu0 0
    %343 = vperm.xlu0 %342, %v305
    %v344 = vpop.permute.xlu0 %343
    %vm346 = vcmask 523264
    %v348 = vsel %vm346, %v290, 0
    %v351 = vsel %vm346, %v291, 0
    %v354 = vsel %vm346, %v292, 0
    %v357 = vsel %vm346, %v293, 0
    %v360 = vsel %vm346, %v294, 0
    %v363 = vsel %vm346, %v295, 0
    %v366 = vsel %vm346, %v296, 0
    %v369 = vsel %vm346, %v297, 0
    %371 = vmatprep.subr.mxu0 0.0
    %372 = vmatpush1.msra.mxu0 %v282
    %373 = vmatprep.subr.mxu0 0.0
    %374 = vmatpush1.msra.mxu0 %v283
    %375 = vmatprep.subr.mxu0 0.0
    %376 = vmatpush1.msra.mxu0 %v284
    %377 = vmatprep.subr.mxu0 0.0
    %378 = vmatpush1.msra.mxu0 %v285
    %379 = vmatprep.subr.mxu0 0.0
    %380 = vmatpush1.msra.mxu0 %v286
    %381 = vmatprep.subr.mxu0 0.0
    %382 = vmatpush1.msra.mxu0 %v287
    %383 = vmatprep.subr.mxu0 0.0
    %384 = vmatpush1.msra.mxu0 %v288
    %385 = vmatprep.subr.mxu0 0.0
    %386 = vmatpush1.msra.mxu0 %v289
    %387 = vmatprep.subr.mxu0 0.0
    %388 = vmatpush1.msra.mxu0 0.0
    %389 = vmatprep.subr.mxu0 0.0
    %390 = vmatpush1.msra.mxu0 0.0
    %391 = vmatprep.subr.mxu0 0.0
    %392 = vmatpush1.msra.mxu0 0.0
    %393 = vmatprep.subr.mxu0 0.0
    %394 = vmatpush1.msra.mxu0 0.0
    %395 = vmatprep.subr.mxu0 0.0
    %396 = vmatpush1.msra.mxu0 0.0
    %397 = vmatprep.subr.mxu0 0.0
    %398 = vmatpush1.msra.mxu0 0.0
    %399 = vmatprep.subr.mxu0 0.0
    %400 = vmatpush1.msra.mxu0 0.0
    %401 = vmatprep.subr.mxu0 0.0
    %402 = vmatpush1.msra.mxu0 0.0
    %403 = vmatprep.subr.mxu0 0.0
    %404 = vmatpush1.msra.mxu0 0.0
    %405 = vmatprep.subr.mxu0 0.0
    %406 = vmatpush1.msra.mxu0 0.0
    %407 = vmatprep.subr.mxu0 0.0
    %408 = vmatpush1.msra.mxu0 0.0
    %409 = vmatprep.subr.mxu0 0.0
    %410 = vmatpush1.msra.mxu0 0.0
    %411 = vmatprep.subr.mxu0 0.0
    %412 = vmatpush1.msra.mxu0 0.0
    %413 = vmatprep.subr.mxu0 0.0
    %414 = vmatpush1.msra.mxu0 0.0
    %415 = vmatprep.subr.mxu0 0.0
    %416 = vmatpush1.msra.mxu0 0.0
    %417 = vmatprep.subr.mxu0 0.0
    %418 = vmatpush1.msra.mxu0 0.0
    %419 = vmatprep.subr.mxu0 0.0
    %420 = vmatpush1.msra.mxu0 0.0
    %421 = vmatprep.subr.mxu0 0.0
    %422 = vmatpush1.msra.mxu0 0.0
    %423 = vmatprep.subr.mxu0 0.0
    %424 = vmatpush1.msra.mxu0 0.0
    %425 = vmatprep.subr.mxu0 0.0
    %426 = vmatpush1.msra.mxu0 0.0
    %427 = vmatprep.subr.mxu0 0.0
    %428 = vmatpush1.msra.mxu0 0.0
    %429 = vmatprep.subr.mxu0 0.0
    %430 = vmatpush1.msra.mxu0 0.0
    %431 = vmatprep.subr.mxu0 0.0
    %432 = vmatpush1.msra.mxu0 0.0
    %433 = vmatprep.subr.mxu0 0.0
    %434 = vmatpush1.msra.mxu0 0.0
    %435 = vmatprep.mubr.f32.mxu0 0.0
    %436 = vmatmul.mubr.f32.gmra.mrb[0].mxu0 %v348
    %v437 = vpop.f32.mrb[0].mxu0
    %v438 = vadd.f32 %v309, %v437
    %v439 = vpop.f32.mrb[0].mxu0
    %440 = vmatprep.mubr.f32.mxu0 0.0
    %441 = vmatmul.mubr.f32.gmra.mrb[0].mxu0 %v351
    %v442 = vpop.f32.mrb[0].mxu0
    %v443 = vadd.f32 %v314, %v442
    %v444 = vpop.f32.mrb[0].mxu0
    %445 = vmatprep.mubr.f32.mxu0 0.0
    %446 = vmatmul.mubr.f32.gmra.mrb[0].mxu0 %v354
    %v447 = vpop.f32.mrb[0].mxu0
    %v448 = vadd.f32 %v319, %v447
    %v449 = vpop.f32.mrb[0].mxu0
    %450 = vmatprep.mubr.f32.mxu0 0.0
    %451 = vmatmul.mubr.f32.gmra.mrb[0].mxu0 %v357
    %v452 = vpop.f32.mrb[0].mxu0
    %v453 = vadd.f32 %v324, %v452
    %v454 = vpop.f32.mrb[0].mxu0
    %455 = vmatprep.mubr.f32.mxu0 0.0
    %456 = vmatmul.mubr.f32.gmra.mrb[0].mxu0 %v360
    %v457 = vpop.f32.mrb[0].mxu0
    %v458 = vadd.f32 %v329, %v457
    %v459 = vpop.f32.mrb[0].mxu0
    %460 = vmatprep.mubr.f32.mxu0 0.0
    %461 = vmatmul.mubr.f32.gmra.mrb[0].mxu0 %v363
    %v462 = vpop.f32.mrb[0].mxu0
    %v463 = vadd.f32 %v334, %v462
    %v464 = vpop.f32.mrb[0].mxu0
    %465 = vmatprep.mubr.f32.mxu0 0.0
    %466 = vmatmul.mubr.f32.gmra.mrb[0].mxu0 %v366
    %v467 = vpop.f32.mrb[0].mxu0
    %v468 = vadd.f32 %v339, %v467
    %v469 = vpop.f32.mrb[0].mxu0
    %470 = vmatprep.mubr.f32.mxu0 0.0
    %471 = vmatmul.mubr.f32.gmra.mrb[0].mxu0 %v369
    %v472 = vpop.f32.mrb[0].mxu0
    %v473 = vadd.f32 %v344, %v472
    %v474 = vpop.f32.mrb[0].mxu0
    %475 = vdwg.mxu0
    %v476 = vmax.f32 %v438, 0.0
    %v477 = vmax.f32 %v443, 0.0
    %v478 = vmax.f32 %v448, 0.0
    %v479 = vmax.f32 %v453, 0.0
    %v480 = vmax.f32 %v458, 0.0
    %v481 = vmax.f32 %v463, 0.0
    %v482 = vmax.f32 %v468, 0.0
    %v483 = vmax.f32 %v473, 0.0
    %v484 = vld [vmem:[%s5] sm:$0xff]
    %v485 = vld [vmem:[%s5 + $0x8] sm:$0xff]
    %v486 = vld [vmem:[%s5 + $0x10] sm:$0xff]
    %v487 = vld [vmem:[%s5 + $0x18] sm:$0xff]
    %v488 = vld [vmem:[%s5 + $0x20] sm:$0xff]
    %v489 = vld [vmem:[%s5 + $0x28] sm:$0xff]
    %v490 = vld [vmem:[%s5 + $0x30] sm:$0xff]
    %v491 = vld [vmem:[%s5 + $0x38] sm:$0xff]
    %493 = vset.pattern.permute.xlu0 0
    %494 = vperm.xlu0 %493, %v484
    %v495 = vpop.permute.xlu0 %494
    %498 = vset.pattern.permute.xlu0 0
    %499 = vperm.xlu0 %498, %v485
    %v500 = vpop.permute.xlu0 %499
    %503 = vset.pattern.permute.xlu0 0
    %504 = vperm.xlu0 %503, %v486
    %v505 = vpop.permute.xlu0 %504
    %508 = vset.pattern.permute.xlu0 0
    %509 = vperm.xlu0 %508, %v487
    %v510 = vpop.permute.xlu0 %509
    %513 = vset.pattern.permute.xlu0 0
    %514 = vperm.xlu0 %513, %v488
    %v515 = vpop.permute.xlu0 %514
    %518 = vset.pattern.permute.xlu0 0
    %519 = vperm.xlu0 %518, %v489
    %v520 = vpop.permute.xlu0 %519
    %523 = vset.pattern.permute.xlu0 0
    %524 = vperm.xlu0 %523, %v490
    %v525 = vpop.permute.xlu0 %524
    %528 = vset.pattern.permute.xlu0 0
    %529 = vperm.xlu0 %528, %v491
    %v530 = vpop.permute.xlu0 %529
    %v532 = vmul.f32 %v495, %v476
    %v533 = vmul.f32 %v500, %v477
    %v534 = vmul.f32 %v505, %v478
    %v535 = vmul.f32 %v510, %v479
    %v536 = vmul.f32 %v515, %v480
    %v537 = vmul.f32 %v520, %v481
    %v538 = vmul.f32 %v525, %v482
    %v539 = vmul.f32 %v530, %v483
    %v540 = vadd.f32 %v532, %v533
    %v541 = vadd.f32 %v540, %v534
    %v542 = vadd.f32 %v541, %v535
    %v543 = vadd.f32 %v542, %v536
    %v544 = vadd.f32 %v543, %v537
    %v545 = vadd.f32 %v544, %v538
    %v546 = vadd.f32 %v545, %v539
    %v547 = vrot.slane %v546, 4
    %v548 = vadd.f32 %v546, %v547
    %v549 = vrot.slane %v548, 2
    %v550 = vadd.f32 %v548, %v549
    %v551 = vrot.slane %v550, 1
    %v552 = vadd.f32 %v550, %v551
    %v553 = vld [vmem:[#allocation2] sm:$0x1]
    %555 = vset.pattern.permute.xlu0 0
    %556 = vperm.xlu0 %555, %v553
    %v557 = vpop.permute.xlu0 %556
    %v559 = vlaneseq
    %v560 = vshrl.u32 %v559, 7
    %v561 = vsub.s32 0, %v560
    %v562 = vrot.slane %v557, %v561
    %v563 = vadd.f32 %v552, %v562
    %s564 = smul.u32 0, 128
    %v565 = vlaneseq
    %v566 = vand.u32 %v565, 127
    %v567 = vstv %s564
    %v568 = vadd.s32 %v567, %v566
    %vm569 = vcmp.lt.s32.totalorder %v568, 8
    %v570 = vsel %vm569, %v563, -1e+30
    %571 = vst [vmem:[#allocation3] sm:$0x1] %v570
    %572 = vmax.xlane.f32.xlu0 %v570
    %v573 = vpop.xlane.xlu0 %572
    %v574 = vsub.f32 %v570, %v573
    %v575 = vmul.f32 %v574, 1.442695
    %v576 = vpow.pop %v575
    %577 = vadd.xlane.f32.xlu0 %v576
    %v578 = vpop.xlane.xlu0 %577
    %vm579 = vcmask 1040384
    %v580 = vsel %vm579, %v573, %v578
    %582 = vset.pattern.permute.xlu0 0
    %583 = vperm.xlu0 %582, %v580
    %v584 = vpop.permute.xlu0 %583
    %586 = vst [vmem:[#allocation5] sm:$0x3] %v584
    // Predicated region
    $region30: #{tpu_custom_call.1} parent=1 // pred_check
      _
    $region31: #{tpu_custom_call.1} parent=1 // pred_check_branch
      %588 = sbr.rel (0) target = $region33
    $region32: #{tpu_custom_call.1} parent=1 // pred_region
      %s590 = ssub.s32 16, 16
      %591 = vsyncadd [#allocation4], %s590
      %s593 = sshll.u32 [#allocation3], 4
      %s594 = int_to_ptr.vmem [resolvable:$true] %s593
      %596 = dma.vmem_to_hbm [thread:$0]  %s594, 16, %s7, [#allocation4]
    $region33: #{tpu_custom_call.1} parent=1 // pred_fallthru
      _
    // Predicated region
    $region34: #{tpu_custom_call.1} parent=1 // pred_check
      _
    $region35: #{tpu_custom_call.1} parent=1 // pred_check_branch
      %598 = sbr.rel (0) target = $region37
    $region36: #{tpu_custom_call.1} parent=1 // pred_region
      %s600 = ssub.s32 32, 32
      %601 = vsyncadd [#allocation6], %s600
      %s603 = sshll.u32 [#allocation5], 4
      %s604 = int_to_ptr.vmem [resolvable:$true] %s603
      %606 = dma.vmem_to_hbm [thread:$0]  %s604, 32, %s8, [#allocation6]
    $region37: #{tpu_custom_call.1} parent=1 // pred_fallthru
      _
    // Predicated region
    $region38: #{tpu_custom_call.1} parent=1 // pred_check
      _
    $region39: #{tpu_custom_call.1} parent=1 // pred_check_branch
      %608 = sbr.rel (0) target = $region41
    $region40: #{tpu_custom_call.1} parent=1 // pred_region
      %609 = dma.done [#allocation4], 16
    $region41: #{tpu_custom_call.1} parent=1 // pred_fallthru
      _
    // Predicated region
    $region42: #{tpu_custom_call.1} parent=1 // pred_check
      _
    $region43: #{tpu_custom_call.1} parent=1 // pred_check_branch
      %611 = sbr.rel (0) target = $region45
    $region44: #{tpu_custom_call.1} parent=1 // pred_region
      %612 = dma.done [#allocation6], 32
    $region45: #{tpu_custom_call.1} parent=1 // pred_fallthru
      _
    %613 = vsyncpa [#allocation4], 1
    %614 = vsyncpa [#allocation6], 1

</llo_original>
